<compile_context>
chip_gen: v6e
topology: v6e:2x2x1
jax: 0.10.0
libtpu: 0.0.40
codegen_flags: <defaults>
</compile_context>

<pallas_src>
import functools

import jax
import jax.numpy as jnp
from jax.experimental import pallas as pl
from jax.experimental.pallas import tpu as pltpu

OBS_DIM = 4      # CartPole-v0: observation_space.shape == (4,)
HIDDEN = 64
OUT_DIM = 1
LANE = 128       # TPU vreg lane width


def _round_up(n, m):
    return ((n + m - 1) // m) * m


def _critic_kernel(xt_ref, w1_ref, b1_ref, w2_ref, b2_ref, o_ref):
    """One batch tile (batch on the lane axis everywhere).

    xt_ref : (OBS_DIM, TILE_B)  observations, batch on lanes
    w1_ref : (HIDDEN, OBS_DIM)  fc1 weight, PyTorch (out, in) layout
    b1_ref : (HIDDEN, 1)        fc1 bias as a column (broadcast over lanes)
    w2_ref : (HIDDEN, 1)        fc2 weight as a column
    b2_ref : (1, 1)             fc2 bias, scalar in SMEM
    o_ref  : (1, TILE_B)        state-value estimates, batch on lanes
    """
    xt = xt_ref[...]                                   # (OBS_DIM, TILE_B)
    w1 = w1_ref[...]                                   # (HIDDEN, OBS_DIM)

    # Layer 1: Linear(OBS_DIM -> HIDDEN) as OBS_DIM broadcasted FMAs on the
    # VPU (a K=4 MXU matmul wastes >98% of the array).  Unrolled at trace.
    acc = w1[:, 0:1] * xt[0:1, :]                      # (HIDDEN, TILE_B)
    for k in range(1, OBS_DIM):
        acc = acc + w1[:, k:k + 1] * xt[k:k + 1, :]
    h = jnp.tanh(acc + b1_ref[...])                    # EUP tanh, lane-dense

    # Layer 2: Linear(HIDDEN -> 1) as multiply + sublane reduce (VPU + XLU);
    # an N=1 matmul would use ~1/256 of the MXU output width.
    v = jnp.sum(w2_ref[...] * h, axis=0, keepdims=True)   # (1, TILE_B)
    o_ref[...] = v + b2_ref[0, 0]


@functools.partial(jax.jit, static_argnames=("tile_b",))
def critic_forward(x, w1, b1, w2, b2, *, tile_b=2048):
    """x: (B, OBS_DIM) f32 -> (B, 1) f32 state-value estimate.

    Note: at tiny rollout batches (B ~ 8) the pallas_call dispatch overhead
    dominates; for that hot path plain XLA `tanh(x @ w1.T + b1.T) @ w2 + b2`
    is preferable.  This kernel targets large-batch evaluation / training.
    """
    B = x.shape[0]

    # Transpose so batch is the lane axis, then pad B to a tile multiple.
    xt = x.T                                           # (OBS_DIM, B)
    tile_b = max(LANE, min(tile_b, _round_up(B, LANE)))
    padded_b = _round_up(B, tile_b)
    if padded_b != B:
        xt = jnp.pad(xt, ((0, 0), (0, padded_b - B)))
    grid = (padded_b // tile_b,)

    cost = pl.CostEstimate(
        flops=2 * B * (OBS_DIM * HIDDEN + HIDDEN),
        transcendentals=B * HIDDEN,
        bytes_accessed=4 * (B * (OBS_DIM + OUT_DIM)
                            + HIDDEN * (OBS_DIM + 2) + 1),
    )

    out = pl.pallas_call(
        _critic_kernel,
        out_shape=jax.ShapeDtypeStruct((OUT_DIM, padded_b), jnp.float32),
        grid=grid,
        in_specs=[
            pl.BlockSpec((OBS_DIM, tile_b), lambda i: (0, i)),   # x, batch-tiled
            pl.BlockSpec((HIDDEN, OBS_DIM), lambda i: (0, 0)),   # w1, resident
            pl.BlockSpec((HIDDEN, 1), lambda i: (0, 0)),         # b1, resident
            pl.BlockSpec((HIDDEN, 1), lambda i: (0, 0)),         # w2, resident
            pl.BlockSpec(memory_space=pltpu.SMEM),               # b2 scalar
        ],
        out_specs=pl.BlockSpec((OUT_DIM, tile_b), lambda i: (0, i)),
        compiler_params=pltpu.CompilerParams(
            dimension_semantics=("parallel",)),
        cost_estimate=cost,
    )(xt, w1, b1, w2, b2)

    # Drop batch padding, restore (B, 1) orientation.
    return out[:, :B].T


def init_params(key):
    """Mimics nn.Linear's uniform(-1/sqrt(fan_in), 1/sqrt(fan_in)) init.

    Weights are stored in the transposed-kernel-friendly layout:
      w1: (HIDDEN, OBS_DIM)  == PyTorch fc1.weight (out, in)
      b1: (HIDDEN, 1)        == fc1.bias as a column
      w2: (HIDDEN, 1)        == PyTorch fc2.weight.T
      b2: (1, 1)             == fc2.bias
    """
    k1, k2, k3, k4 = jax.random.split(key, 4)
    lim1 = 1.0 / float(OBS_DIM) ** 0.5
    lim2 = 1.0 / float(HIDDEN) ** 0.5
    w1 = jax.random.uniform(k1, (HIDDEN, OBS_DIM), jnp.float32, -lim1, lim1)
    b1 = jax.random.uniform(k2, (HIDDEN, 1), jnp.float32, -lim1, lim1)
    w2 = jax.random.uniform(k3, (HIDDEN, 1), jnp.float32, -lim2, lim2)
    b2 = jax.random.uniform(k4, (1, 1), jnp.float32, -lim2, lim2)
    return w1, b1, w2, b2


if __name__ == "__main__":
    key = jax.random.PRNGKey(0)
    kx, kp = jax.random.split(key)

    batch = 8   # small rollout-sized batch; same kernel handles large B
    x = jax.random.normal(kx, (batch, OBS_DIM), jnp.float32)
    w1, b1, w2, b2 = init_params(kp)

    out = critic_forward(x, w1, b1, w2, b2)
    out = jax.block_until_ready(out)

    # Reference check in plain JAX (same math as the PyTorch module).
    ref = jnp.tanh(x @ w1.T + b1.T) @ w2 + b2[0, 0]
    assert out.shape == (batch, OUT_DIM)
    assert jnp.allclose(out, ref, atol=1e-5, rtol=1e-5)

    print("KERNEL_OK")
</pallas_src>

<mosaic_0001>
module attributes {stable_mosaic.version = 11 : i64} {
  func.func @_critic_kernel(%arg0: i32, %arg1: memref<4x128xf32, #tpu.memory_space<vmem>>, %arg2: memref<64x4xf32, #tpu.memory_space<vmem>>, %arg3: memref<64x1xf32, #tpu.memory_space<vmem>>, %arg4: memref<64x1xf32, #tpu.memory_space<vmem>>, %arg5: memref<1x1xf32, #tpu.memory_space<smem>>, %arg6: memref<1x128xf32, #tpu.memory_space<vmem>>) attributes {dimension_semantics = [#tpu.dimension_semantics<parallel>], iteration_bounds = array<i64: 1>, scalar_prefetch = 0 : i64, scratch_operands = 0 : i64, tpu.core_type = #tpu.core_type<tc>, window_params = [{transform_indices = @transform_0, window_bounds = array<i64: 4, 128>}, {pipeline_mode = #tpu.pipeline_mode<synchronous>, transform_indices = @transform_1, window_bounds = array<i64: 64, 4>}, {pipeline_mode = #tpu.pipeline_mode<synchronous>, transform_indices = @transform_2, window_bounds = array<i64: 64, 1>}, {pipeline_mode = #tpu.pipeline_mode<synchronous>, transform_indices = @transform_3, window_bounds = array<i64: 64, 1>}, {transform_indices = @transform_4, window_bounds = array<i64: 1, 1>}, {transform_indices = @transform_5, window_bounds = array<i64: 1, 128>}]} {
    %c0 = arith.constant 0 : index
    %c0_0 = arith.constant 0 : index
    %0 = vector.load %arg1[%c0, %c0_0] : memref<4x128xf32, #tpu.memory_space<vmem>>, vector<4x128xf32>
    %c0_1 = arith.constant 0 : index
    %c0_2 = arith.constant 0 : index
    %1 = vector.load %arg2[%c0_1, %c0_2] : memref<64x4xf32, #tpu.memory_space<vmem>>, vector<64x4xf32>
    %2 = vector.extract_strided_slice %1 {offsets = [0, 0], sizes = [64, 1], strides = [1, 1]} : vector<64x4xf32> to vector<64x1xf32>
    %3 = vector.extract_strided_slice %0 {offsets = [0, 0], sizes = [1, 128], strides = [1, 1]} : vector<4x128xf32> to vector<1x128xf32>
    %4 = vector.broadcast %2 : vector<64x1xf32> to vector<64x128xf32>
    %5 = vector.broadcast %3 : vector<1x128xf32> to vector<64x128xf32>
    %6 = arith.mulf %4, %5 : vector<64x128xf32>
    %7 = vector.extract_strided_slice %1 {offsets = [0, 1], sizes = [64, 1], strides = [1, 1]} : vector<64x4xf32> to vector<64x1xf32>
    %8 = vector.extract_strided_slice %0 {offsets = [1, 0], sizes = [1, 128], strides = [1, 1]} : vector<4x128xf32> to vector<1x128xf32>
    %9 = vector.broadcast %7 : vector<64x1xf32> to vector<64x128xf32>
    %10 = vector.broadcast %8 : vector<1x128xf32> to vector<64x128xf32>
    %11 = arith.mulf %9, %10 : vector<64x128xf32>
    %12 = arith.addf %6, %11 : vector<64x128xf32>
    %13 = vector.extract_strided_slice %1 {offsets = [0, 2], sizes = [64, 1], strides = [1, 1]} : vector<64x4xf32> to vector<64x1xf32>
    %14 = vector.extract_strided_slice %0 {offsets = [2, 0], sizes = [1, 128], strides = [1, 1]} : vector<4x128xf32> to vector<1x128xf32>
    %15 = vector.broadcast %13 : vector<64x1xf32> to vector<64x128xf32>
    %16 = vector.broadcast %14 : vector<1x128xf32> to vector<64x128xf32>
    %17 = arith.mulf %15, %16 : vector<64x128xf32>
    %18 = arith.addf %12, %17 : vector<64x128xf32>
    %19 = vector.extract_strided_slice %1 {offsets = [0, 3], sizes = [64, 1], strides = [1, 1]} : vector<64x4xf32> to vector<64x1xf32>
    %20 = vector.extract_strided_slice %0 {offsets = [3, 0], sizes = [1, 128], strides = [1, 1]} : vector<4x128xf32> to vector<1x128xf32>
    %21 = vector.broadcast %19 : vector<64x1xf32> to vector<64x128xf32>
    %22 = vector.broadcast %20 : vector<1x128xf32> to vector<64x128xf32>
    %23 = arith.mulf %21, %22 : vector<64x128xf32>
    %24 = arith.addf %18, %23 : vector<64x128xf32>
    %c0_3 = arith.constant 0 : index
    %c0_4 = arith.constant 0 : index
    %25 = vector.load %arg3[%c0_3, %c0_4] : memref<64x1xf32, #tpu.memory_space<vmem>>, vector<64x1xf32>
    %26 = vector.broadcast %25 : vector<64x1xf32> to vector<64x128xf32>
    %27 = arith.addf %24, %26 : vector<64x128xf32>
    %28 = math.tanh %27 : vector<64x128xf32>
    %c0_5 = arith.constant 0 : index
    %c0_6 = arith.constant 0 : index
    %29 = vector.load %arg4[%c0_5, %c0_6] : memref<64x1xf32, #tpu.memory_space<vmem>>, vector<64x1xf32>
    %30 = vector.broadcast %29 : vector<64x1xf32> to vector<64x128xf32>
    %31 = arith.mulf %30, %28 : vector<64x128xf32>
    %cst = arith.constant dense<0.000000e+00> : vector<128xf32>
    %32 = vector.multi_reduction <add>, %31, %cst [0] : vector<64x128xf32> to vector<128xf32>
    %33 = vector.shape_cast %32 : vector<128xf32> to vector<1x128xf32>
    %c0_7 = arith.constant 0 : index
    %c0_8 = arith.constant 0 : index
    %34 = memref.load %arg5[%c0_7, %c0_8] : memref<1x1xf32, #tpu.memory_space<smem>>
    %35 = vector.broadcast %34 : f32 to vector<1x128xf32>
    %36 = arith.addf %33, %35 : vector<1x128xf32>
    %c0_9 = arith.constant 0 : index
    %c0_10 = arith.constant 0 : index
    %37 = vector.load %arg6[%c0_9, %c0_10] : memref<1x128xf32, #tpu.memory_space<vmem>>, vector<1x128xf32>
    tpu.vector_store %arg6[%c0_9, %c0_10], %36 {strides = array<i32>} : memref<1x128xf32, #tpu.memory_space<vmem>>, vector<1x128xf32>,
    return
  }
  func.func @transform_0(%arg0: i32) -> (i32, i32) {
    %c0_i32 = arith.constant 0 : i32
    %c0_i32_0 = arith.constant 0 : i32
    return %c0_i32, %arg0 : i32, i32
  }
  func.func @transform_1(%arg0: i32) -> (i32, i32) {
    %c0_i32 = arith.constant 0 : i32
    %c0_i32_0 = arith.constant 0 : i32
    %c0_i32_1 = arith.constant 0 : i32
    return %c0_i32, %c0_i32_0 : i32, i32
  }
  func.func @transform_2(%arg0: i32) -> (i32, i32) {
    %c0_i32 = arith.constant 0 : i32
    %c0_i32_0 = arith.constant 0 : i32
    %c0_i32_1 = arith.constant 0 : i32
    return %c0_i32, %c0_i32_0 : i32, i32
  }
  func.func @transform_3(%arg0: i32) -> (i32, i32) {
    %c0_i32 = arith.constant 0 : i32
    %c0_i32_0 = arith.constant 0 : i32
    %c0_i32_1 = arith.constant 0 : i32
    return %c0_i32, %c0_i32_0 : i32, i32
  }
  func.func @transform_4(%arg0: i32) -> (i32, i32) {
    %c0_i32 = arith.constant 0 : i32
    %c0_i32_0 = arith.constant 0 : i32
    %c0_i32_1 = arith.constant 0 : i32
    return %c0_i32, %c0_i32_0 : i32, i32
  }
  func.func @transform_5(%arg0: i32) -> (i32, i32) {
    %c0_i32 = arith.constant 0 : i32
    %c0_i32_0 = arith.constant 0 : i32
    return %c0_i32, %arg0 : i32, i32
  }
}

</mosaic_0001>

<llo_original>
// kernel: critic_forward.1
$region0: #{critic_forward.1}
  #allocation0 [shape = 'u32[]', space=smem, size = 0x4, offset = 0x4, fixed_abs, tag = 'smem constant byte address 0x4 - core index']
  #allocation1 [shape = 'u32[144,128]{1,0:T(1,128)}', space=vmem, size = 0x12000, scoped, tag = 'internal scratch']
  #allocation2 [shape = 'f32[1,1]{1,0:T(1,128)S(6)}', space=smem, size = 0x200, scoped, tag = 'scoped memory for critic_forward.1']
  %s0 = inlined_call_operand.vmem [shape: f32[4,128], index: 0, kind: input, shape index: {}]
  %s1 = inlined_call_operand.vmem [shape: f32[64,4], index: 1, kind: input, shape index: {}]
  %s2 = inlined_call_operand.vmem [shape: f32[64,1], index: 2, kind: input, shape index: {}]
  %s3 = inlined_call_operand.vmem [shape: f32[64,1], index: 3, kind: input, shape index: {}]
  %s4 = inlined_call_operand.<no memory space> [shape: f32[1,1], index: 4, kind: input, shape index: {}]
  %s5 = inlined_call_operand.vmem [shape: f32[1,128], index: 5, kind: output, shape index: {}]
  %s6 = sld [smem:[#allocation0]]
  $region30: #{critic_forward.1} parent=0
    _
  %s8 = ssub.s32 1, %s6
  %s9 = scalar_select 0, %s8, %s6
  %10 = sst [smem:[#allocation2]] %s4
  // Predicated region
  $region2: #{critic_forward.1} parent=0 // pred_check
    _
  $region3: #{critic_forward.1} parent=0 // pred_check_branch
    %12 = sbr.rel (0) target = $region5
  $region4: #{critic_forward.1} parent=0 // pred_region
    _
  $region5: #{critic_forward.1} parent=0 // pred_fallthru
    _
  // Predicated region
  $region6: #{critic_forward.1} parent=0 // pred_check
    _
  $region7: #{critic_forward.1} parent=0 // pred_check_branch
    %14 = sbr.rel (0) target = $region9
  $region8: #{critic_forward.1} parent=0 // pred_region
    _
  $region9: #{critic_forward.1} parent=0 // pred_fallthru
    _
  // Predicated region
  $region10: #{critic_forward.1} parent=0 // pred_check
    _
  $region11: #{critic_forward.1} parent=0 // pred_check_branch
    %16 = sbr.rel (0) target = $region13
  $region12: #{critic_forward.1} parent=0 // pred_region
    _
  $region13: #{critic_forward.1} parent=0 // pred_fallthru
    _
  // Predicated region
  $region14: #{critic_forward.1} parent=0 // pred_check
    _
  $region15: #{critic_forward.1} parent=0 // pred_check_branch
    %18 = sbr.rel (0) target = $region17
  $region16: #{critic_forward.1} parent=0 // pred_region
    _
  $region17: #{critic_forward.1} parent=0 // pred_fallthru
    _
  // Predicated region
  $region18: #{critic_forward.1} parent=0 // pred_check
    _
  $region19: #{critic_forward.1} parent=0 // pred_check_branch
    %20 = sbr.rel (0) target = $region21
  $region20: #{critic_forward.1} parent=0 // pred_region
    _
  $region21: #{critic_forward.1} parent=0 // pred_fallthru
    _
  %v21 = vld [vmem:[%s0] sm:$0xf]
  %v22 = vld [vmem:[%s1] sm:$0xff]
  %v23 = vld [vmem:[%s1 + $0x8] sm:$0xff]
  %v24 = vld [vmem:[%s1 + $0x10] sm:$0xff]
  %v25 = vld [vmem:[%s1 + $0x18] sm:$0xff]
  %v26 = vld [vmem:[%s1 + $0x20] sm:$0xff]
  %v27 = vld [vmem:[%s1 + $0x28] sm:$0xff]
  %v28 = vld [vmem:[%s1 + $0x30] sm:$0xff]
  %v29 = vld [vmem:[%s1 + $0x38] sm:$0xff]
  %31 = vset.pattern.permute.xlu0 0
  %32 = vperm.xlu0 %31, %v22
  %v33 = vpop.permute.xlu0 %32
  %36 = vset.pattern.permute.xlu0 0
  %37 = vperm.xlu0 %36, %v23
  %v38 = vpop.permute.xlu0 %37
  %41 = vset.pattern.permute.xlu0 0
  %42 = vperm.xlu0 %41, %v24
  %v43 = vpop.permute.xlu0 %42
  %46 = vset.pattern.permute.xlu0 0
  %47 = vperm.xlu0 %46, %v25
  %v48 = vpop.permute.xlu0 %47
  %51 = vset.pattern.permute.xlu0 0
  %52 = vperm.xlu0 %51, %v26
  %v53 = vpop.permute.xlu0 %52
  %56 = vset.pattern.permute.xlu0 0
  %57 = vperm.xlu0 %56, %v27
  %v58 = vpop.permute.xlu0 %57
  %61 = vset.pattern.permute.xlu0 0
  %62 = vperm.xlu0 %61, %v28
  %v63 = vpop.permute.xlu0 %62
  %66 = vset.pattern.permute.xlu0 0
  %67 = vperm.xlu0 %66, %v29
  %v68 = vpop.permute.xlu0 %67
  %v70 = vlaneseq
  %v71 = vshrl.u32 %v70, 7
  %v72 = vsub.s32 0, %v71
  %v73 = vrot.slane %v21, %v72
  %v74 = vmul.f32 %v33, %v73
  %v75 = vmul.f32 %v38, %v73
  %v76 = vmul.f32 %v43, %v73
  %v77 = vmul.f32 %v48, %v73
  %v78 = vmul.f32 %v53, %v73
  %v79 = vmul.f32 %v58, %v73
  %v80 = vmul.f32 %v63, %v73
  %v81 = vmul.f32 %v68, %v73
  %82 = vset.pattern.permute.xlu0 1
  %83 = vperm.xlu0 %82, %v22
  %v84 = vpop.permute.xlu0 %83
  %86 = vset.pattern.permute.xlu0 1
  %87 = vperm.xlu0 %86, %v23
  %v88 = vpop.permute.xlu0 %87
  %90 = vset.pattern.permute.xlu0 1
  %91 = vperm.xlu0 %90, %v24
  %v92 = vpop.permute.xlu0 %91
  %94 = vset.pattern.permute.xlu0 1
  %95 = vperm.xlu0 %94, %v25
  %v96 = vpop.permute.xlu0 %95
  %98 = vset.pattern.permute.xlu0 1
  %99 = vperm.xlu0 %98, %v26
  %v100 = vpop.permute.xlu0 %99
  %102 = vset.pattern.permute.xlu0 1
  %103 = vperm.xlu0 %102, %v27
  %v104 = vpop.permute.xlu0 %103
  %106 = vset.pattern.permute.xlu0 1
  %107 = vperm.xlu0 %106, %v28
  %v108 = vpop.permute.xlu0 %107
  %110 = vset.pattern.permute.xlu0 1
  %111 = vperm.xlu0 %110, %v29
  %v112 = vpop.permute.xlu0 %111
  %v114 = vlaneseq
  %v115 = vshrl.u32 %v114, 7
  %v116 = vsub.s32 1, %v115
  %v117 = vrot.slane %v21, %v116
  %v118 = vmul.f32 %v84, %v117
  %v119 = vmul.f32 %v88, %v117
  %v120 = vmul.f32 %v92, %v117
  %v121 = vmul.f32 %v96, %v117
  %v122 = vmul.f32 %v100, %v117
  %v123 = vmul.f32 %v104, %v117
  %v124 = vmul.f32 %v108, %v117
  %v125 = vmul.f32 %v112, %v117
  %v126 = vadd.f32 %v74, %v118
  %v127 = vadd.f32 %v75, %v119
  %v128 = vadd.f32 %v76, %v120
  %v129 = vadd.f32 %v77, %v121
  %v130 = vadd.f32 %v78, %v122
  %v131 = vadd.f32 %v79, %v123
  %v132 = vadd.f32 %v80, %v124
  %v133 = vadd.f32 %v81, %v125
  %134 = vset.pattern.permute.xlu0 2
  %135 = vperm.xlu0 %134, %v22
  %v136 = vpop.permute.xlu0 %135
  %138 = vset.pattern.permute.xlu0 2
  %139 = vperm.xlu0 %138, %v23
  %v140 = vpop.permute.xlu0 %139
  %142 = vset.pattern.permute.xlu0 2
  %143 = vperm.xlu0 %142, %v24
  %v144 = vpop.permute.xlu0 %143
  %146 = vset.pattern.permute.xlu0 2
  %147 = vperm.xlu0 %146, %v25
  %v148 = vpop.permute.xlu0 %147
  %150 = vset.pattern.permute.xlu0 2
  %151 = vperm.xlu0 %150, %v26
  %v152 = vpop.permute.xlu0 %151
  %154 = vset.pattern.permute.xlu0 2
  %155 = vperm.xlu0 %154, %v27
  %v156 = vpop.permute.xlu0 %155
  %158 = vset.pattern.permute.xlu0 2
  %159 = vperm.xlu0 %158, %v28
  %v160 = vpop.permute.xlu0 %159
  %162 = vset.pattern.permute.xlu0 2
  %163 = vperm.xlu0 %162, %v29
  %v164 = vpop.permute.xlu0 %163
  %v166 = vlaneseq
  %v167 = vshrl.u32 %v166, 7
  %v168 = vsub.s32 2, %v167
  %v169 = vrot.slane %v21, %v168
  %v170 = vmul.f32 %v136, %v169
  %v171 = vmul.f32 %v140, %v169
  %v172 = vmul.f32 %v144, %v169
  %v173 = vmul.f32 %v148, %v169
  %v174 = vmul.f32 %v152, %v169
  %v175 = vmul.f32 %v156, %v169
  %v176 = vmul.f32 %v160, %v169
  %v177 = vmul.f32 %v164, %v169
  %v178 = vadd.f32 %v126, %v170
  %v179 = vadd.f32 %v127, %v171
  %v180 = vadd.f32 %v128, %v172
  %v181 = vadd.f32 %v129, %v173
  %v182 = vadd.f32 %v130, %v174
  %v183 = vadd.f32 %v131, %v175
  %v184 = vadd.f32 %v132, %v176
  %v185 = vadd.f32 %v133, %v177
  %186 = vset.pattern.permute.xlu0 3
  %187 = vperm.xlu0 %186, %v22
  %v188 = vpop.permute.xlu0 %187
  %190 = vset.pattern.permute.xlu0 3
  %191 = vperm.xlu0 %190, %v23
  %v192 = vpop.permute.xlu0 %191
  %194 = vset.pattern.permute.xlu0 3
  %195 = vperm.xlu0 %194, %v24
  %v196 = vpop.permute.xlu0 %195
  %198 = vset.pattern.permute.xlu0 3
  %199 = vperm.xlu0 %198, %v25
  %v200 = vpop.permute.xlu0 %199
  %202 = vset.pattern.permute.xlu0 3
  %203 = vperm.xlu0 %202, %v26
  %v204 = vpop.permute.xlu0 %203
  %206 = vset.pattern.permute.xlu0 3
  %207 = vperm.xlu0 %206, %v27
  %v208 = vpop.permute.xlu0 %207
  %210 = vset.pattern.permute.xlu0 3
  %211 = vperm.xlu0 %210, %v28
  %v212 = vpop.permute.xlu0 %211
  %214 = vset.pattern.permute.xlu0 3
  %215 = vperm.xlu0 %214, %v29
  %v216 = vpop.permute.xlu0 %215
  %v218 = vlaneseq
  %v219 = vshrl.u32 %v218, 7
  %v220 = vsub.s32 3, %v219
  %v221 = vrot.slane %v21, %v220
  %v222 = vmul.f32 %v188, %v221
  %v223 = vmul.f32 %v192, %v221
  %v224 = vmul.f32 %v196, %v221
  %v225 = vmul.f32 %v200, %v221
  %v226 = vmul.f32 %v204, %v221
  %v227 = vmul.f32 %v208, %v221
  %v228 = vmul.f32 %v212, %v221
  %v229 = vmul.f32 %v216, %v221
  %v230 = vadd.f32 %v178, %v222
  %v231 = vadd.f32 %v179, %v223
  %v232 = vadd.f32 %v180, %v224
  %v233 = vadd.f32 %v181, %v225
  %v234 = vadd.f32 %v182, %v226
  %v235 = vadd.f32 %v183, %v227
  %v236 = vadd.f32 %v184, %v228
  %v237 = vadd.f32 %v185, %v229
  %v238 = vld [vmem:[%s2] sm:$0xff]
  %v239 = vld [vmem:[%s2 + $0x8] sm:$0xff]
  %v240 = vld [vmem:[%s2 + $0x10] sm:$0xff]
  %v241 = vld [vmem:[%s2 + $0x18] sm:$0xff]
  %v242 = vld [vmem:[%s2 + $0x20] sm:$0xff]
  %v243 = vld [vmem:[%s2 + $0x28] sm:$0xff]
  %v244 = vld [vmem:[%s2 + $0x30] sm:$0xff]
  %v245 = vld [vmem:[%s2 + $0x38] sm:$0xff]
  %247 = vset.pattern.permute.xlu0 0
  %248 = vperm.xlu0 %247, %v238
  %v249 = vpop.permute.xlu0 %248
  %252 = vset.pattern.permute.xlu0 0
  %253 = vperm.xlu0 %252, %v239
  %v254 = vpop.permute.xlu0 %253
  %257 = vset.pattern.permute.xlu0 0
  %258 = vperm.xlu0 %257, %v240
  %v259 = vpop.permute.xlu0 %258
  %262 = vset.pattern.permute.xlu0 0
  %263 = vperm.xlu0 %262, %v241
  %v264 = vpop.permute.xlu0 %263
  %267 = vset.pattern.permute.xlu0 0
  %268 = vperm.xlu0 %267, %v242
  %v269 = vpop.permute.xlu0 %268
  %272 = vset.pattern.permute.xlu0 0
  %273 = vperm.xlu0 %272, %v243
  %v274 = vpop.permute.xlu0 %273
  %277 = vset.pattern.permute.xlu0 0
  %278 = vperm.xlu0 %277, %v244
  %v279 = vpop.permute.xlu0 %278
  %282 = vset.pattern.permute.xlu0 0
  %283 = vperm.xlu0 %282, %v245
  %v284 = vpop.permute.xlu0 %283
  %v286 = vadd.f32 %v230, %v249
  %v287 = vadd.f32 %v231, %v254
  %v288 = vadd.f32 %v232, %v259
  %v289 = vadd.f32 %v233, %v264
  %v290 = vadd.f32 %v234, %v269
  %v291 = vadd.f32 %v235, %v274
  %v292 = vadd.f32 %v236, %v279
  %v293 = vadd.f32 %v237, %v284
  %v294 = vtanh.pop %v286
  %v295 = vtanh.pop %v287
  %v296 = vtanh.pop %v288
  %v297 = vtanh.pop %v289
  %v298 = vtanh.pop %v290
  %v299 = vtanh.pop %v291
  %v300 = vtanh.pop %v292
  %v301 = vtanh.pop %v293
  %v302 = vld [vmem:[%s3] sm:$0xff]
  %v303 = vld [vmem:[%s3 + $0x8] sm:$0xff]
  %v304 = vld [vmem:[%s3 + $0x10] sm:$0xff]
  %v305 = vld [vmem:[%s3 + $0x18] sm:$0xff]
  %v306 = vld [vmem:[%s3 + $0x20] sm:$0xff]
  %v307 = vld [vmem:[%s3 + $0x28] sm:$0xff]
  %v308 = vld [vmem:[%s3 + $0x30] sm:$0xff]
  %v309 = vld [vmem:[%s3 + $0x38] sm:$0xff]
  %311 = vset.pattern.permute.xlu0 0
  %312 = vperm.xlu0 %311, %v302
  %v313 = vpop.permute.xlu0 %312
  %316 = vset.pattern.permute.xlu0 0
  %317 = vperm.xlu0 %316, %v303
  %v318 = vpop.permute.xlu0 %317
  %321 = vset.pattern.permute.xlu0 0
  %322 = vperm.xlu0 %321, %v304
  %v323 = vpop.permute.xlu0 %322
  %326 = vset.pattern.permute.xlu0 0
  %327 = vperm.xlu0 %326, %v305
  %v328 = vpop.permute.xlu0 %327
  %331 = vset.pattern.permute.xlu0 0
  %332 = vperm.xlu0 %331, %v306
  %v333 = vpop.permute.xlu0 %332
  %336 = vset.pattern.permute.xlu0 0
  %337 = vperm.xlu0 %336, %v307
  %v338 = vpop.permute.xlu0 %337
  %341 = vset.pattern.permute.xlu0 0
  %342 = vperm.xlu0 %341, %v308
  %v343 = vpop.permute.xlu0 %342
  %346 = vset.pattern.permute.xlu0 0
  %347 = vperm.xlu0 %346, %v309
  %v348 = vpop.permute.xlu0 %347
  %v350 = vmul.f32 %v313, %v294
  %v351 = vmul.f32 %v318, %v295
  %v352 = vmul.f32 %v323, %v296
  %v353 = vmul.f32 %v328, %v297
  %v354 = vmul.f32 %v333, %v298
  %v355 = vmul.f32 %v338, %v299
  %v356 = vmul.f32 %v343, %v300
  %v357 = vmul.f32 %v348, %v301
  %v358 = vadd.f32 %v350, %v351
  %v359 = vadd.f32 %v358, %v352
  %v360 = vadd.f32 %v359, %v353
  %v361 = vadd.f32 %v360, %v354
  %v362 = vadd.f32 %v361, %v355
  %v363 = vadd.f32 %v362, %v356
  %v364 = vadd.f32 %v363, %v357
  %v365 = vrot.slane %v364, 4
  %v366 = vadd.f32 %v364, %v365
  %v367 = vrot.slane %v366, 2
  %v368 = vadd.f32 %v366, %v367
  %v369 = vrot.slane %v368, 1
  %v370 = vadd.f32 %v368, %v369
  %s371 = sld [smem:[#allocation2]]
  %v372 = vstv %s371
  %v373 = vadd.f32 %v370, %v372
  %374 = vst [vmem:[%s5] sm:$0x1] %v373
  // Predicated region
  $region22: #{critic_forward.1} parent=0 // pred_check
    _
  $region23: #{critic_forward.1} parent=0 // pred_check_branch
    %376 = sbr.rel (0) target = $region25
  $region24: #{critic_forward.1} parent=0 // pred_region
    _
  $region25: #{critic_forward.1} parent=0 // pred_fallthru
    _
  // Predicated region
  $region26: #{critic_forward.1} parent=0 // pred_check
    _
  $region27: #{critic_forward.1} parent=0 // pred_check_branch
    %378 = sbr.rel (0) target = $region29
  $region28: #{critic_forward.1} parent=0 // pred_region
    _
  $region29: #{critic_forward.1} parent=0 // pred_fallthru
    _

</llo_original>
